<compile_context>
chip_gen: v7x
topology: tpu7x:2x2x1
jax: 0.10.0
libtpu: 0.0.40
codegen_flags: <defaults>
</compile_context>

<pallas_src>
import functools

import jax
import jax.numpy as jnp
from jax import lax
from jax.experimental import pallas as pl
from jax.experimental.pallas import tpu as pltpu

_HB = 8  # row-slab height (sublane granularity)


def _patch_kernel(off_ref, hblk_ref, canvas_ref, x_ref, o_ref, *, size):
    """off_ref: SMEM (2,) int32 [rx, ry]; hblk_ref: SMEM (nb_max,) int32 row-slab indices;
    canvas_ref: (1, C, 8, W) pre-placed patch slab; x_ref/o_ref: (B, C, 8, W) image slab."""
    B, C, HB, W = x_ref.shape
    rx = off_ref[0]
    ry = off_ref[1]

    # Global row offset of this 8-row slab (same table the index_maps read -> consistent).
    row0 = hblk_ref[pl.program_id(1)] * HB

    hh = row0 + lax.broadcasted_iota(jnp.int32, (HB, W), 0)
    ww = lax.broadcasted_iota(jnp.int32, (HB, W), 1)
    in_patch = (hh >= rx) & (hh < rx + size) & (ww >= ry) & (ww < ry + size)

    mask = jnp.broadcast_to(in_patch[None, None], (B, C, HB, W))
    placed = jnp.broadcast_to(canvas_ref[...], (B, C, HB, W))
    o_ref[...] = jnp.where(mask, placed, x_ref[...]).astype(o_ref.dtype)


def _pick_block_batch(n, per_image_block_bytes, target_bytes=1 << 20):
    """Largest divisor of n with blocks <= ~1 MiB, preferring >=2 grid steps (megacore)."""
    divisors = [b for b in range(1, n + 1)
                if n % b == 0 and b * per_image_block_bytes <= target_bytes]
    if not divisors:
        return 1
    multi_step = [b for b in divisors if n // b >= 2]
    return max(multi_step) if multi_step else max(divisors)


def generator_patch_forward(x, perturbation, offsets):
    """x: (N, C, H, W); perturbation: (1, C, S, S); offsets: (2,) int32 [rx, ry].

    Returns x with x[:, :, rx:rx+S, ry:ry+S] = perturbation (broadcast over batch),
    matching Generator_Patch.forward (which mutates `input` in place).  Donate x at the
    jit boundary so the alias is honored and untouched rows never move through HBM.
    """
    N, C, H, W = x.shape
    S = perturbation.shape[-1]
    assert perturbation.shape == (1, C, S, S)

    rx = offsets[0]
    ry = offsets[1]

    # Pre-place the patch into a zero canvas (one image worth of HBM; tiny XLA op,
    # batch-invariant so it is done once, not per grid step).
    canvas = lax.dynamic_update_slice(
        jnp.zeros((1, C, H, W), x.dtype), perturbation.astype(x.dtype), (0, 0, rx, ry))

    # Static upper bound on the number of 8-row slabs the patch can intersect, and the
    # (dynamic) table of slab indices; extra entries are clamped to the last patch slab,
    # which makes the duplicate visits idempotent and keeps block indices in bounds.
    nb_max = (S + _HB - 2) // _HB + 1
    first_blk = rx // _HB
    last_blk = (rx + S - 1) // _HB
    hblocks = jnp.minimum(first_blk + jnp.arange(nb_max, dtype=jnp.int32),
                          last_blk).astype(jnp.int32)

    per_image_block_bytes = C * _HB * W * x.dtype.itemsize
    B = _pick_block_batch(N, per_image_block_bytes)
    grid = (N // B, nb_max)

    canvas_spec = pl.BlockSpec((1, C, _HB, W), lambda n, j, off, hblk: (0, 0, hblk[j], 0))
    x_spec = pl.BlockSpec((B, C, _HB, W), lambda n, j, off, hblk: (n, 0, hblk[j], 0))
    out_spec = pl.BlockSpec((B, C, _HB, W), lambda n, j, off, hblk: (n, 0, hblk[j], 0))

    return pl.pallas_call(
        functools.partial(_patch_kernel, size=S),
        out_shape=jax.ShapeDtypeStruct((N, C, H, W), x.dtype),
        grid_spec=pltpu.PrefetchScalarGridSpec(
            num_scalar_prefetch=2,          # offsets, hblocks -> SMEM
            grid=grid,
            in_specs=[canvas_spec, x_spec],
            out_specs=out_spec,
        ),
        # Operand order: offsets(0), hblocks(1), canvas(2), x(3) -> output 0.
        input_output_aliases={3: 0},
        compiler_params=pltpu.CompilerParams(
            dimension_semantics=("parallel", "arbitrary"),
            vmem_limit_bytes=32 * 1024 * 1024,
        ),
    )(offsets, hblocks, canvas, x)


if __name__ == "__main__":
    key = jax.random.PRNGKey(0)
    kx, kp, ko1, ko2 = jax.random.split(key, 4)

    N, C, H, W, S = 2, 3, 16, 16, 10
    x = jax.random.normal(kx, (N, C, H, W), jnp.float32)             # module input (NCHW)
    perturbation = jax.random.normal(kp, (1, C, S, S), jnp.float32)  # nn.Parameter

    # TODO(synk): PyTorch draws np.random.randint on the host every forward; here the
    # offsets are drawn host-side and passed in as a traced device argument (never baked
    # into the jit as constants).
    rx = int(jax.random.randint(ko1, (), 0, H - S))
    ry = int(jax.random.randint(ko2, (), 0, W - S))
    offsets = jnp.array([rx, ry], dtype=jnp.int32)

    # Reference computed BEFORE the call because x is donated into the kernel.
    ref = lax.dynamic_update_slice(
        x, jnp.broadcast_to(perturbation, (N, C, S, S)), (0, 0, rx, ry))
    ref = jax.block_until_ready(ref)

    fwd = jax.jit(generator_patch_forward, donate_argnums=(0,))
    y = fwd(x, perturbation, offsets)
    y = jax.block_until_ready(y)

    assert y.shape == (N, C, H, W), y.shape
    assert bool(jnp.all(jnp.isfinite(y)))
    assert bool(jnp.allclose(y, ref, atol=1e-6, rtol=1e-6))
    print("KERNEL_OK")
</pallas_src>

<mosaic_0001>
module attributes {stable_mosaic.version = 11 : i64} {
  func.func @_patch_kernel(%arg0: i32, %arg1: i32, %arg2: memref<2xi32, #tpu.memory_space<smem>>, %arg3: memref<3xi32, #tpu.memory_space<smem>>, %arg4: memref<1x3x8x16xf32, #tpu.memory_space<vmem>>, %arg5: memref<1x3x8x16xf32, #tpu.memory_space<vmem>>, %arg6: memref<1x3x8x16xf32, #tpu.memory_space<vmem>>) attributes {dimension_semantics = [#tpu.dimension_semantics<parallel>, #tpu.dimension_semantics<arbitrary>], iteration_bounds = array<i64: 2, 3>, scalar_prefetch = 2 : i64, scratch_operands = 0 : i64, tpu.core_type = #tpu.core_type<tc>, window_params = [{transform_indices = @transform_0, window_bounds = array<i64: 1, 3, 8, 16>}, {transform_indices = @transform_1, window_bounds = array<i64: 1, 3, 8, 16>}, {transform_indices = @transform_2, window_bounds = array<i64: 1, 3, 8, 16>}]} {
    %c0 = arith.constant 0 : index
    %0 = memref.load %arg2[%c0] : memref<2xi32, #tpu.memory_space<smem>>
    %c1 = arith.constant 1 : index
    %1 = memref.load %arg2[%c1] : memref<2xi32, #tpu.memory_space<smem>>
    %2 = arith.index_cast %arg1 : i32 to index
    %3 = memref.load %arg3[%2] : memref<3xi32, #tpu.memory_space<smem>>
    %c8_i32 = arith.constant 8 : i32
    %4 = arith.muli %3, %c8_i32 : i32
    %5 = tpu.iota {dimensions = array<i32: 0>} : vector<8x16xi32>
    %6 = vector.broadcast %4 : i32 to vector<8x16xi32>
    %7 = arith.addi %6, %5 : vector<8x16xi32>
    %8 = tpu.iota {dimensions = array<i32: 1>} : vector<8x16xi32>
    %9 = vector.broadcast %0 : i32 to vector<8x16xi32>
    %10 = arith.cmpi sge, %7, %9 : vector<8x16xi32>
    %c10_i32 = arith.constant 10 : i32
    %11 = arith.addi %0, %c10_i32 : i32
    %12 = vector.broadcast %11 : i32 to vector<8x16xi32>
    %13 = arith.cmpi slt, %7, %12 : vector<8x16xi32>
    %14 = arith.andi %10, %13 : vector<8x16xi1>
    %15 = vector.broadcast %1 : i32 to vector<8x16xi32>
    %16 = arith.cmpi sge, %8, %15 : vector<8x16xi32>
    %17 = arith.andi %14, %16 : vector<8x16xi1>
    %c10_i32_0 = arith.constant 10 : i32
    %18 = arith.addi %1, %c10_i32_0 : i32
    %19 = vector.broadcast %18 : i32 to vector<8x16xi32>
    %20 = arith.cmpi slt, %8, %19 : vector<8x16xi32>
    %21 = arith.andi %17, %20 : vector<8x16xi1>
    %22 = vector.shape_cast %21 : vector<8x16xi1> to vector<1x1x8x16xi1>
    %23 = vector.shape_cast %22 : vector<1x1x8x16xi1> to vector<1x1x8x16xi1>
    %24 = vector.broadcast %23 : vector<1x1x8x16xi1> to vector<1x3x8x16xi1>
    %c0_1 = arith.constant 0 : index
    %c0_2 = arith.constant 0 : index
    %c0_3 = arith.constant 0 : index
    %c0_4 = arith.constant 0 : index
    %25 = vector.load %arg4[%c0_1, %c0_2, %c0_3, %c0_4] : memref<1x3x8x16xf32, #tpu.memory_space<vmem>>, vector<1x3x8x16xf32>
    %c0_5 = arith.constant 0 : index
    %c0_6 = arith.constant 0 : index
    %c0_7 = arith.constant 0 : index
    %c0_8 = arith.constant 0 : index
    %26 = vector.load %arg5[%c0_5, %c0_6, %c0_7, %c0_8] : memref<1x3x8x16xf32, #tpu.memory_space<vmem>>, vector<1x3x8x16xf32>
    %27 = arith.select %24, %25, %26 : vector<1x3x8x16xi1>, vector<1x3x8x16xf32>
    %c0_9 = arith.constant 0 : index
    %c0_10 = arith.constant 0 : index
    %c0_11 = arith.constant 0 : index
    %c0_12 = arith.constant 0 : index
    %28 = vector.load %arg6[%c0_9, %c0_10, %c0_11, %c0_12] : memref<1x3x8x16xf32, #tpu.memory_space<vmem>>, vector<1x3x8x16xf32>
    tpu.vector_store %arg6[%c0_9, %c0_10, %c0_11, %c0_12], %27 {strides = array<i32>} : memref<1x3x8x16xf32, #tpu.memory_space<vmem>>, vector<1x3x8x16xf32>,
    return
  }
  func.func @transform_0(%arg0: i32, %arg1: i32, %arg2: memref<2xi32, #tpu.memory_space<smem>>, %arg3: memref<3xi32, #tpu.memory_space<smem>>) -> (i32, i32, i32, i32) {
    %0 = arith.index_cast %arg1 : i32 to index
    %1 = memref.load %arg3[%0] : memref<3xi32, #tpu.memory_space<smem>>
    %c0_i32 = arith.constant 0 : i32
    %c0_i32_0 = arith.constant 0 : i32
    %c0_i32_1 = arith.constant 0 : i32
    %c0_i32_2 = arith.constant 0 : i32
    return %c0_i32, %c0_i32_0, %1, %c0_i32_1 : i32, i32, i32, i32
  }
  func.func @transform_1(%arg0: i32, %arg1: i32, %arg2: memref<2xi32, #tpu.memory_space<smem>>, %arg3: memref<3xi32, #tpu.memory_space<smem>>) -> (i32, i32, i32, i32) {
    %0 = arith.index_cast %arg1 : i32 to index
    %1 = memref.load %arg3[%0] : memref<3xi32, #tpu.memory_space<smem>>
    %c0_i32 = arith.constant 0 : i32
    %c0_i32_0 = arith.constant 0 : i32
    %c0_i32_1 = arith.constant 0 : i32
    return %arg0, %c0_i32, %1, %c0_i32_0 : i32, i32, i32, i32
  }
  func.func @transform_2(%arg0: i32, %arg1: i32, %arg2: memref<2xi32, #tpu.memory_space<smem>>, %arg3: memref<3xi32, #tpu.memory_space<smem>>) -> (i32, i32, i32, i32) {
    %0 = arith.index_cast %arg1 : i32 to index
    %1 = memref.load %arg3[%0] : memref<3xi32, #tpu.memory_space<smem>>
    %c0_i32 = arith.constant 0 : i32
    %c0_i32_0 = arith.constant 0 : i32
    %c0_i32_1 = arith.constant 0 : i32
    return %arg0, %c0_i32, %1, %c0_i32_0 : i32, i32, i32, i32
  }
}

</mosaic_0001>

<llo_original>
// kernel: generator_patch_forward.1
$region0: #{generator_patch_forward.1}
  #allocation0 [shape = 'u32[]', space=smem, size = 0x4, offset = 0x4, fixed_abs, tag = 'smem constant byte address 0x4 - core index']
  #allocation1 [shape = 'u32[144,128]{1,0:T(1,128)}', space=vmem, size = 0x12000, scoped, tag = 'internal scratch']
  #allocation2 [shape = 's32[1]{0}', space=sflag, size = 0x4, scoped, tag = 'scoped memory for generator_patch_forward.1']
  #allocation3 [shape = 'u8[512]{0}', space=smem, size = 0x200, scoped, tag = 'prefetched SMEM operand 0']
  #allocation4 [shape = 'u8[512]{0}', space=smem, size = 0x200, scoped, tag = 'prefetched SMEM operand 1']
  %s0 = inlined_call_operand.vmem [shape: s32[2], index: 0, kind: input, shape index: {}]
  %s1 = inlined_call_operand.vmem [shape: s32[3], index: 1, kind: input, shape index: {}]
  %s2 = inlined_call_operand.vmem [shape: f32[1,3,16,16], index: 2, kind: input, shape index: {}]
  %s3 = inlined_call_operand.hbm [shape: f32[2,3,16,16], index: 3, kind: input, shape index: {}, may-alias: {3,4}]
  %s4 = inlined_call_operand.hbm [shape: f32[2,3,16,16], index: 4, kind: output, shape index: {}, may-alias: {3,4}]
  %s5 = sld [smem:[#allocation0]]
  $region83: #{generator_patch_forward.1} parent=0
    _
  %s7 = ssub.s32 1, %s5
  %s8 = scalar_select 0, %s7, %s5
  %s9 = sshll.u32 %s0, 4
  %s10 = int_to_ptr.vmem [resolvable:$true] %s9
  %12 = dma.vmem_to_smem %s10, 16, [#allocation3], [#allocation2]
  %s13 = sshll.u32 %s1, 4
  %s14 = int_to_ptr.vmem [resolvable:$true] %s13
  %16 = dma.vmem_to_smem %s14, 16, [#allocation4], [#allocation2]
  %17 = dma.done [#allocation2], 32
  %18 = sfence
  $region1: #{generator_patch_forward.1} parent=0
    #allocation5 [shape = 'u8[24576]{0}', space=vmem, size = 0x6000, scoped, tag = 'input window, operand 2']
    #allocation6 [shape = 'u8[24576]{0}', space=vmem, size = 0x6000, scoped, tag = 'input window, operand 3']
    #allocation7 [shape = 's32[2]{0}', space=sflag, size = 0x8, scoped, tag = 'scoped memory for generator_patch_forward.1']
    #allocation8 [shape = 's32[2]{0}', space=sflag, size = 0x8, scoped, tag = 'scoped memory for generator_patch_forward.1']
    #allocation9 [shape = 'u8[24576]{0}', space=vmem, size = 0x6000, scoped, tag = 'output window, operand 0']
    %19 = vsyncpa [#allocation7], 0
    %s20 = scalar_lea.sflag [#allocation7], 1
    %21 = vsyncpa %s20, 0
    %22 = vsyncpa [#allocation8], 0
    %s23 = scalar_lea.sflag [#allocation8], 1
    %24 = vsyncpa %s23, 0
    loop: start=0, step=1, limit=8
    $region2: #{generator_patch_forward.1} parent=1 // loop_pre_header
      _
    $region3: #{generator_patch_forward.1} parent=1 // loop_header
      %s26 = sphi 0, %s30
      %p27 = scmp.ge.s32.totalorder %s26, 8
      %s33 = sphi 0, %s45
      %s34 = sphi 0, %s41
      %s35 = sphi 0, %s33
      %s36 = sphi 0, %s34
      %s37 = sphi 0, %s35
      %s38 = sphi 0, %s36
      %s50 = sphi 0, %s52
      %s53 = sphi 0, %s50
      %s54 = sphi 0, %s53
      %s70 = sphi 0, %s54
      %s80 = sphi 0, %s82
      %s83 = sphi 0, %s80
      %s84 = sphi 0, %s83
      %s100 = sphi 0, %s84
      %s110 = sphi 0, %s112
      %s113 = sphi 0, %s110
      %s114 = sphi 0, %s113
      %s130 = sphi 0, %s114
    $region4: #{generator_patch_forward.1} parent=1 // loop_header_branch
      %29 = sbr.rel (%p27) target = $region8
    $region5: #{generator_patch_forward.1} parent=1 // loop_body
      %s31 = ssub.s32 %s26, 1
      %s32 = ssub.s32 %s26, 2
      %s39 = sadd.s32 1, %s34
      %p40 = scmp.ge.s32.totalorder %s39, 3
      %s41 = scalar_select %p40, 0, %s39
      %s42 = sadd.s32 1, %s33
      %s43 = scalar_select %p40, %s42, %s33
      %p44 = scmp.ge.s32.totalorder %s43, 2
      %s45 = scalar_select %p44, 0, %s43
      %s46 = sld [smem:[#allocation4 + %s34]]
      %s47 = sld [smem:[#allocation4 + %s41]]
      %s48 = ssub.s32 %s46, %s47
      %p49 = scmp.eq.s32.totalorder %s48, 0
      %s51 = sadd.s32 %s50, 1
      %s52 = scalar_select %p49, %s50, %s51
      %p55 = pneg %p49
      %p56 = scmp.eq.s32.totalorder %s26, 5
      %p57 = por %p55, %p56
      %p58 = scmp.ne.s32.totalorder %s50, %s53
      %p59 = scmp.eq.s32.totalorder %s26, 0
      %p60 = por %p58, %p59
      %p61 = scmp.ne.s32.totalorder %s50, %s53
      %p62 = scmp.eq.s32.totalorder %s31, 5
      %p63 = por %p61, %p62
      %p64 = scmp.ne.s32.totalorder %s53, %s54
      %p65 = scmp.eq.s32.totalorder %s31, 0
      %p66 = por %p64, %p65
      %p67 = scmp.ne.s32.totalorder %s53, %s54
      %p68 = scmp.eq.s32.totalorder %s32, 5
      %p69 = por %p67, %p68
      %p71 = scmp.ne.s32.totalorder %s54, %s70
      %p72 = scmp.eq.s32.totalorder %s32, 0
      %p73 = por %p71, %p72
      %s74 = sld [smem:[#allocation4 + %s34]]
      %s75 = sld [smem:[#allocation4 + %s41]]
      %s76 = ssub.s32 %s33, %s45
      %s77 = ssub.s32 %s74, %s75
      %s78 = sor.u32 %s76, %s77
      %p79 = scmp.eq.s32.totalorder %s78, 0
      %s81 = sadd.s32 %s80, 1
      %s82 = scalar_select %p79, %s80, %s81
      %p85 = pneg %p79
      %p86 = scmp.eq.s32.totalorder %s26, 5
      %p87 = por %p85, %p86
      %p88 = scmp.ne.s32.totalorder %s80, %s83
      %p89 = scmp.eq.s32.totalorder %s26, 0
      %p90 = por %p88, %p89
      %p91 = scmp.ne.s32.totalorder %s80, %s83
      %p92 = scmp.eq.s32.totalorder %s31, 5
      %p93 = por %p91, %p92
      %p94 = scmp.ne.s32.totalorder %s83, %s84
      %p95 = scmp.eq.s32.totalorder %s31, 0
      %p96 = por %p94, %p95
      %p97 = scmp.ne.s32.totalorder %s83, %s84
      %p98 = scmp.eq.s32.totalorder %s32, 5
      %p99 = por %p97, %p98
      %p101 = scmp.ne.s32.totalorder %s84, %s100
      %p102 = scmp.eq.s32.totalorder %s32, 0
      %p103 = por %p101, %p102
      %s104 = sld [smem:[#allocation4 + %s34]]
      %s105 = sld [smem:[#allocation4 + %s41]]
      %s106 = ssub.s32 %s33, %s45
      %s107 = ssub.s32 %s104, %s105
      %s108 = sor.u32 %s106, %s107
      %p109 = scmp.eq.s32.totalorder %s108, 0
      %s111 = sadd.s32 %s110, 1
      %s112 = scalar_select %p109, %s110, %s111
      %p115 = pneg %p109
      %p116 = scmp.eq.s32.totalorder %s26, 5
      %p117 = por %p115, %p116
      %p118 = scmp.ne.s32.totalorder %s110, %s113
      %p119 = scmp.eq.s32.totalorder %s26, 0
      %p120 = por %p118, %p119
      %p121 = scmp.ne.s32.totalorder %s110, %s113
      %p122 = scmp.eq.s32.totalorder %s31, 5
      %p123 = por %p121, %p122
      %p124 = scmp.ne.s32.totalorder %s113, %s114
      %p125 = scmp.eq.s32.totalorder %s31, 0
      %p126 = por %p124, %p125
      %p127 = scmp.ne.s32.totalorder %s113, %s114
      %p128 = scmp.eq.s32.totalorder %s32, 5
      %p129 = por %p127, %p128
      %p131 = scmp.ne.s32.totalorder %s114, %s130
      %p132 = scmp.eq.s32.totalorder %s32, 0
      %p133 = por %p131, %p132
      %p134 = scmp.le.s32.totalorder 1, %s26
      %p135 = scmp.lt.s32.totalorder %s26, 7
      %p136 = pnand %p134, %p135
      %p137 = pneg %p136
      // Predicated region
      $region9: #{generator_patch_forward.1} parent=5 // pred_check
        _
      $region10: #{generator_patch_forward.1} parent=5 // pred_check_branch
        %139 = sbr.rel (%p136) target = $region12
      $region11: #{generator_patch_forward.1} parent=5 // pred_region
        %s140 = ssub.s32 %s26, 1
      $region12: #{generator_patch_forward.1} parent=5 // pred_fallthru
        _
      %p141 = scmp.lt.s32.totalorder %s26, 6
      // Predicated region
      $region13: #{generator_patch_forward.1} parent=5 // pred_check
        %p142 = pneg %p141
      $region14: #{generator_patch_forward.1} parent=5 // pred_check_branch
        %144 = sbr.rel (%p142) target = $region16
      $region15: #{generator_patch_forward.1} parent=5 // pred_region
        // Predicated region
        $region17: #{generator_patch_forward.1} parent=15 // pred_check
          %p145 = pneg %p60
        $region18: #{generator_patch_forward.1} parent=15 // pred_check_branch
          %147 = sbr.rel (%p145) target = $region20
        $region19: #{generator_patch_forward.1} parent=15 // pred_region
          %s148 = sand.u32 %s50, 1
          %s149 = sand.u32 %s50, 1
          %s150 = smul.addr %s149, 24
          %s151 = scalar_lea.vmem [#allocation5], %s150
          %s152 = sld [smem:[#allocation4 + %s34]]
          %s153 = smul.addr %s152, 8
          %s154 = scalar_lea.vmem %s2, %s153
          // Predicated region
          $region21: #{generator_patch_forward.1} parent=19 // pred_check
            _
          $region22: #{generator_patch_forward.1} parent=19 // pred_check_branch
            %156 = sbr.rel (0) target = $region24
          $region23: #{generator_patch_forward.1} parent=19 // pred_region
            // Predicated region
            $region25: #{generator_patch_forward.1} parent=23 // pred_check
              _
            $region26: #{generator_patch_forward.1} parent=23 // pred_check_branch
              %158 = sbr.rel (0) target = $region28
            $region27: #{generator_patch_forward.1} parent=23 // pred_region
              // Predicated region
              $region40: #{generator_patch_forward.1} parent=27 // pred_check
                _
              $region41: #{generator_patch_forward.1} parent=27 // pred_check_branch
                %177 = sbr.rel (0) target = $region43
              $region42: #{generator_patch_forward.1} parent=27 // pred_region
                loop: start=0, step=1, limit=1
                $region44: #{generator_patch_forward.1} parent=42 // loop_pre_header
                  _
                $region45: #{generator_patch_forward.1} parent=42 // loop_header
                  %s179 = sphi 0, %s183
                  %p180 = scmp.ge.s32.totalorder %s179, 1
                  %s184 = sphi %s154, %s154
                  %s185 = sphi %s151, %s151
                $region46: #{generator_patch_forward.1} parent=42 // loop_header_branch
                  %182 = sbr.rel (%p180) target = $region50
                $region47: #{generator_patch_forward.1} parent=42 // loop_body
                  %v186 = vld [vmem:[%s184] sm:$0xff]
                  %187 = vst [vmem:[%s185] sm:$0xff] %v186
                  %v188 = vld [vmem:[%s184 + $0x10] sm:$0xff]
                  %189 = vst [vmem:[%s185 + $0x8] sm:$0xff] %v188
                  %v190 = vld [vmem:[%s184 + $0x20] sm:$0xff]
                  %191 = vst [vmem:[%s185 + $0x10] sm:$0xff] %v190
                $region48: #{generator_patch_forward.1} parent=42 // loop_footer
                  %s183 = sadd.s32 1, %s179
                $region49: #{generator_patch_forward.1} parent=42 // loop_footer_branch
                  %178 = sbr.rel target = $region45
                $region50: #{generator_patch_forward.1} parent=42 // loop_exit
                  _
              $region43: #{generator_patch_forward.1} parent=27 // pred_fallthru
                _
              // Predicated region
              $region51: #{generator_patch_forward.1} parent=27 // pred_check
                _
              $region52: #{generator_patch_forward.1} parent=27 // pred_check_branch
                %193 = sbr.rel target = $region54
              $region53: #{generator_patch_forward.1} parent=27 // pred_region
                _
              $region54: #{generator_patch_forward.1} parent=27 // pred_fallthru
                _
            $region28: #{generator_patch_forward.1} parent=23 // pred_fallthru
              _
            // Predicated region
            $region29: #{generator_patch_forward.1} parent=23 // pred_check
              _
            $region30: #{generator_patch_forward.1} parent=23 // pred_check_branch
              %160 = sbr.rel target = $region32
            $region31: #{generator_patch_forward.1} parent=23 // pred_region
              loop: start=0, step=1, limit=1
              $region33: #{generator_patch_forward.1} parent=31 // loop_pre_header
                _
              $region34: #{generator_patch_forward.1} parent=31 // loop_header
                %s163 = sphi 0, %s167
                %p164 = scmp.ge.s32.totalorder %s163, 1
                %s168 = sphi %s154, %s154
                %s169 = sphi %s151, %s151
              $region35: #{generator_patch_forward.1} parent=31 // loop_header_branch
                %166 = sbr.rel (%p164) target = $region39
              $region36: #{generator_patch_forward.1} parent=31 // loop_body
                %v170 = vld [vmem:[%s168] sm:$0xff]
                %171 = vst [vmem:[%s169] sm:$0xff] %v170
                %v172 = vld [vmem:[%s168 + $0x10] sm:$0xff]
                %173 = vst [vmem:[%s169 + $0x8] sm:$0xff] %v172
                %v174 = vld [vmem:[%s168 + $0x20] sm:$0xff]
                %175 = vst [vmem:[%s169 + $0x10] sm:$0xff] %v174
              $region37: #{generator_patch_forward.1} parent=31 // loop_footer
                %s167 = sadd.s32 1, %s163
              $region38: #{generator_patch_forward.1} parent=31 // loop_footer_branch
                %162 = sbr.rel target = $region34
              $region39: #{generator_patch_forward.1} parent=31 // loop_exit
                _
            $region32: #{generator_patch_forward.1} parent=23 // pred_fallthru
              _
          $region24: #{generator_patch_forward.1} parent=19 // pred_fallthru
            _
          %194 = vnop
        $region20: #{generator_patch_forward.1} parent=15 // pred_fallthru
          _
        // Predicated region
        $region55: #{generator_patch_forward.1} parent=15 // pred_check
          %p195 = pneg %p90
        $region56: #{generator_patch_forward.1} parent=15 // pred_check_branch
          %197 = sbr.rel (%p195) target = $region58
        $region57: #{generator_patch_forward.1} parent=15 // pred_region
          %s198 = sand.u32 %s80, 1
          %s199 = scalar_lea.sflag [#allocation7], %s198
          %s200 = sand.u32 %s80, 1
          %s201 = smul.addr %s200, 24
          %s202 = scalar_lea.vmem [#allocation6], %s201
          %s203 = sld [smem:[#allocation4 + %s34]]
          %s205 = ssub.s32 384, 384
          %206 = vsyncadd %s199, %s205
          %s207 = smul.addr %s33, 6
          %s208 = sadd.s32 %s203, %s207
          %s209 = smul.addr %s208, 128
          %s210 = scalar_lea.hbm %s3, %s209
          %s211 = sshll.u32 %s202, 4
          %s212 = int_to_ptr.vmem [resolvable:$true] %s211
          %217 = dma.hbm_to_vmem [thread:$0]  %s210, 384, %s212, %s199, 256, 128, 8
        $region58: #{generator_patch_forward.1} parent=15 // pred_fallthru
          _
      $region16: #{generator_patch_forward.1} parent=5 // pred_fallthru
        _
      %p218 = scmp.le.s32.totalorder 1, %s26
      %p219 = scmp.lt.s32.totalorder %s26, 7
      %p220 = pnand %p218, %p219
      %p221 = pneg %p220
      // Predicated region
      $region59: #{generator_patch_forward.1} parent=5 // pred_check
        _
      $region60: #{generator_patch_forward.1} parent=5 // pred_check_branch
        %223 = sbr.rel (%p220) target = $region62
      $region61: #{generator_patch_forward.1} parent=5 // pred_region
        %s224 = ssub.s32 %s26, 1
        %s225 = sand.u32 %s53, 1
        %s226 = sand.u32 %s53, 1
        %s227 = smul.addr %s226, 24
        %s228 = scalar_lea.vmem [#allocation5], %s227
        // Predicated region
        $region63: #{generator_patch_forward.1} parent=61 // pred_check
          %p229 = pneg %p66
        $region64: #{generator_patch_forward.1} parent=61 // pred_check_branch
          %231 = sbr.rel (%p229) target = $region66
        $region65: #{generator_patch_forward.1} parent=61 // pred_region
          _
        $region66: #{generator_patch_forward.1} parent=61 // pred_fallthru
          _
        %s232 = sand.u32 %s83, 1
        %s233 = scalar_lea.sflag [#allocation7], %s232
        %s234 = sand.u32 %s83, 1
        %s235 = smul.addr %s234, 24
        %s236 = scalar_lea.vmem [#allocation6], %s235
        // Predicated region
        $region67: #{generator_patch_forward.1} parent=61 // pred_check
          %p237 = pneg %p96
        $region68: #{generator_patch_forward.1} parent=61 // pred_check_branch
          %239 = sbr.rel (%p237) target = $region70
        $region69: #{generator_patch_forward.1} parent=61 // pred_region
          %240 = dma.done %s233, 384
        $region70: #{generator_patch_forward.1} parent=61 // pred_fallthru
          _
        %s241 = sand.u32 %s53, 1
        %s242 = sand.u32 %s53, 1
        %s243 = smul.addr %s242, 24
        %s244 = scalar_lea.vmem [#allocation5], %s243
        %p245 = pneg %p66
        %p246 = pneg %p63
        %s247 = sand.u32 %s83, 1
        %s248 = scalar_lea.sflag [#allocation7], %s247
        %s249 = sand.u32 %s83, 1
        %s250 = smul.addr %s249, 24
        %s251 = scalar_lea.vmem [#allocation6], %s250
        %p252 = pneg %p96
        %p253 = pneg %p93
        %p254 = pneg %p126
        %p255 = pneg %p123
        %s256 = sand.u32 %s113, 1
        %s257 = scalar_lea.sflag [#allocation8], %s256
        %s258 = sand.u32 %s113, 1
        %s259 = smul.addr %s258, 24
        %s260 = scalar_lea.vmem [#allocation9], %s259
        %s261 = sld [smem:[#allocation4 + %s36]]
        %s262 = sld [smem:[#allocation4 + %s36]]
        %s263 = sld [smem:[#allocation4 + %s36]]
        %s264 = sld [smem:[#allocation3]]
        %s265 = sld [smem:[#allocation3 + $0x1]]
        %s266 = sld [smem:[#allocation4 + %s36]]
        %s267 = smul.u32 %s266, 8
        %v268 = vlaneseq
        %v269 = vshrl.u32 %v268, 7
        %v270 = vstv %s267
        %v271 = vadd.s32 %v270, %v269
        %v272 = vlaneseq
        %v273 = vand.u32 %v272, 127
        %v274 = vstv %s264
        %vm275 = vcmp.ge.s32.totalorder %v271, %v274
        %s276 = sadd.s32 %s264, 10
        %v277 = vstv %s276
        %vm278 = vcmp.lt.s32.totalorder %v271, %v277
        %vm279 = vmand %vm275, %vm278
        %v280 = vstv %s265
        %vm281 = vcmp.ge.s32.totalorder %v273, %v280
        %vm282 = vmand %vm279, %vm281
        %s283 = sadd.s32 %s265, 10
        %v284 = vstv %s283
        %vm285 = vcmp.lt.s32.totalorder %v273, %v284
        %vm286 = vmand %vm282, %vm285
        %v287 = vsel %vm286, 1, 0
        %vm288 = vcmp.eq.s32.totalorder %v287, 1
        %v289 = vld [vmem:[%s228] sm:$0xff]
        %v290 = vld [vmem:[%s228 + $0x8] sm:$0xff]
        %v291 = vld [vmem:[%s228 + $0x10] sm:$0xff]
        %v292 = vld [vmem:[%s236] sm:$0xff]
        %v293 = vld [vmem:[%s236 + $0x8] sm:$0xff]
        %v294 = vld [vmem:[%s236 + $0x10] sm:$0xff]
        %v295 = vsel %vm288, %v289, %v292
        %v296 = vsel %vm288, %v290, %v293
        %v297 = vsel %vm288, %v291, %v294
        %vm298 = vcmask 130048
        %299 = vst.msk [vmem:[%s260] sm:$0xff] %vm298, %v295
        %300 = vst.msk [vmem:[%s260 + $0x8] sm:$0xff] %vm298, %v296
        %301 = vst.msk [vmem:[%s260 + $0x10] sm:$0xff] %vm298, %v297
        %s302 = sand.u32 %s113, 1
        %s303 = scalar_lea.sflag [#allocation8], %s302
        %s304 = sand.u32 %s113, 1
        %s305 = smul.addr %s304, 24
        %s306 = scalar_lea.vmem [#allocation9], %s305
        // Predicated region
        $region71: #{generator_patch_forward.1} parent=61 // pred_check
          %p307 = pneg %p123
        $region72: #{generator_patch_forward.1} parent=61 // pred_check_branch
          %309 = sbr.rel (%p307) target = $region74
        $region73: #{generator_patch_forward.1} parent=61 // pred_region
          %s310 = sld [smem:[#allocation4 + %s36]]
          %s312 = ssub.s32 384, 384
          %313 = vsyncadd %s303, %s312
          %s314 = smul.addr %s35, 6
          %s315 = sadd.s32 %s310, %s314
          %s316 = smul.addr %s315, 128
          %s317 = scalar_lea.hbm %s4, %s316
          %s318 = sshll.u32 %s306, 4
          %s319 = int_to_ptr.vmem [resolvable:$true] %s318
          %324 = dma.vmem_to_hbm [thread:$0]  %s319, 384, %s317, %s303, 128, 256, 8
        $region74: #{generator_patch_forward.1} parent=61 // pred_fallthru
          _
      $region62: #{generator_patch_forward.1} parent=5 // pred_fallthru
        _
      %p325 = scmp.le.s32.totalorder 2, %s26
      // Predicated region
      $region75: #{generator_patch_forward.1} parent=5 // pred_check
        %p326 = pneg %p325
      $region76: #{generator_patch_forward.1} parent=5 // pred_check_branch
        %328 = sbr.rel (%p326) target = $region78
      $region77: #{generator_patch_forward.1} parent=5 // pred_region
        %s329 = ssub.s32 %s26, 2
        // Predicated region
        $region79: #{generator_patch_forward.1} parent=77 // pred_check
          %p330 = pneg %p129
        $region80: #{generator_patch_forward.1} parent=77 // pred_check_branch
          %332 = sbr.rel (%p330) target = $region82
        $region81: #{generator_patch_forward.1} parent=77 // pred_region
          %s333 = sand.u32 %s114, 1
          %s334 = scalar_lea.sflag [#allocation8], %s333
          %s335 = sand.u32 %s114, 1
          %s336 = smul.addr %s335, 24
          %s337 = scalar_lea.vmem [#allocation9], %s336
          %338 = dma.done %s334, 384
        $region82: #{generator_patch_forward.1} parent=77 // pred_fallthru
          _
      $region78: #{generator_patch_forward.1} parent=5 // pred_fallthru
        _
    $region6: #{generator_patch_forward.1} parent=1 // loop_footer
      %s30 = sadd.s32 1, %s26
    $region7: #{generator_patch_forward.1} parent=1 // loop_footer_branch
      %25 = sbr.rel target = $region3
    $region8: #{generator_patch_forward.1} parent=1 // loop_exit
      _
    %339 = vsyncpa [#allocation7], 1
    %s340 = scalar_lea.sflag [#allocation7], 1
    %341 = vsyncpa %s340, 1
    %342 = vsyncpa [#allocation8], 1
    %s343 = scalar_lea.sflag [#allocation8], 1
    %344 = vsyncpa %s343, 1

</llo_original>
